<compile_context>
chip_gen: v6e
topology: v6e:2x2x1
jax: 0.10.0
libtpu: 0.0.40
codegen_flags: <defaults>
</compile_context>

<pallas_src>
import functools

import jax
import jax.numpy as jnp
from jax.experimental import pallas as pl
from jax.experimental.pallas import tpu as pltpu

EPS = 1e-5
EXPANSION = 4
# Explicit scoped-VMEM budget: safe on v5e/v6e (128 MiB phys) and v7x (64 MiB
# phys, 32 MiB default scoped). Worst-case ResNet tile set stays well below.
VMEM_LIMIT = 32 * 1024 * 1024


def _row_tile(ho, wo, max_rows=512):
    """Largest divisor of `ho` whose output tile (d * wo rows) fits max_rows."""
    best = 1
    for d in range(1, ho + 1):
        if ho % d == 0 and d * wo <= max_rows:
            best = d
    return best


# --------------------------------------------------------------------------
# Pallas kernels
# --------------------------------------------------------------------------
def _pw_kernel(x_ref, w_ref, b_ref, *rest, has_residual, apply_relu):
    """Fused 1x1 conv (BN scale pre-folded into W) + bias (+res) (+relu)."""
    if has_residual:
        r_ref, o_ref = rest
    else:
        (o_ref,) = rest
    y = jnp.dot(x_ref[...], w_ref[...], preferred_element_type=jnp.float32)
    y = y + b_ref[...]
    if has_residual:
        y = y + r_ref[...]
    if apply_relu:
        y = jnp.maximum(y, 0.0)
    o_ref[...] = y.astype(o_ref.dtype)


def _conv3x3_kernel(x_ref, w_ref, b_ref, o_ref, pad_ref, *, H, W, stride, th, wo):
    """3x3 conv + folded BN + ReLU on one spatial row tile of one image.

    x_ref:   (1, H, W, Cin)     full image block (re-used across row tiles)
    w_ref:   (3, 3*Cin, Cout)   kw-fused, BN-scale pre-folded weights
    b_ref:   (1, Cout)
    o_ref:   (1, TH, Wo, Cout)  output row tile
    pad_ref: (H+2, W+2, Cin)    VMEM scratch: zero-padded image (built at t==0)
    """
    t = pl.program_id(1)
    cin = x_ref.shape[-1]
    cout = o_ref.shape[-1]

    # Build the zero-padded image in VMEM once per image (no HBM pad pass).
    @pl.when(t == 0)
    def _():
        interior = x_ref[0]                                        # (H, W, Cin)
        zc = jnp.zeros((H, 1, cin), jnp.float32)
        rowp = jnp.concatenate([zc, interior, zc], axis=1)         # (H, W+2, Cin)
        zr = jnp.zeros((1, W + 2, cin), jnp.float32)
        pad_ref[...] = jnp.concatenate([zr, rowp, zr], axis=0)     # (H+2, W+2, Cin)

    base = pl.multiple_of(t * (th * stride), th * stride)
    nrows = (th - 1) * stride + 1
    ncols = (wo - 1) * stride + 1

    acc = None
    for kh in range(3):
        slab = pad_ref[pl.ds(base + kh, nrows), :, :]              # (nrows, W+2, Cin)
        if stride > 1:
            slab = slab[::stride]                                  # (th, W+2, Cin)
        # kw-fused im2col along W (contiguous with C in NHWC): K = 3*Cin.
        win = jnp.concatenate(
            [slab[:, kw:kw + ncols:stride, :] for kw in range(3)], axis=-1)
        contrib = jnp.dot(win.reshape(th * wo, 3 * cin), w_ref[kh],
                          preferred_element_type=jnp.float32)
        acc = contrib if acc is None else acc + contrib

    y = jnp.maximum(acc + b_ref[...], 0.0)
    o_ref[...] = y.reshape(1, th, wo, cout).astype(o_ref.dtype)


def _conv3_proj_kernel(o2_ref, x_ref, w3_ref, b3_ref, ws_ref, bs_ref, o_ref,
                       *, stride, th, wo):
    """conv3 (1x1) + bn3 + strided projection shortcut + add + relu, fused.

    o2_ref: (1, TH, Wo, planes)  conv2 output row tile
    x_ref:  (1, H, W, Cin)       raw input image block (re-used across tiles)
    """
    t = pl.program_id(1)
    planes = o2_ref.shape[-1]
    cin = x_ref.shape[-1]
    cout = o_ref.shape[-1]

    # main path
    main = jnp.dot(o2_ref[0].reshape(th * wo, planes), w3_ref[...],
                   preferred_element_type=jnp.float32) + b3_ref[...]

    # shortcut: stride-s subsample done in-kernel (no wrapper HBM pass)
    base = pl.multiple_of(t * (th * stride), th * stride)
    nrows = (th - 1) * stride + 1
    ncols = (wo - 1) * stride + 1
    xs = x_ref[0, pl.ds(base, nrows), :, :]                        # (nrows, W, Cin)
    if stride > 1:
        xs = xs[::stride]                                          # (th, W, Cin)
    xs = xs[:, 0:ncols:stride, :]                                  # (th, wo, Cin)
    sc = jnp.dot(xs.reshape(th * wo, cin), ws_ref[...],
                 preferred_element_type=jnp.float32) + bs_ref[...]

    y = jnp.maximum(main + sc, 0.0)
    o_ref[...] = y.reshape(1, th, wo, cout).astype(o_ref.dtype)


# --------------------------------------------------------------------------
# Pallas-call wrappers
# --------------------------------------------------------------------------
def pointwise_conv_bn(x2, w_scaled, bias, residual=None, apply_relu=True):
    """x2: (M, Cin), w_scaled: (Cin, Cout), bias: (1, Cout) -> (M, Cout)."""
    M, Cin = x2.shape
    Cout = w_scaled.shape[1]
    TM = M if M < 512 else 512               # big row tile; cdiv grid below
    grid = (pl.cdiv(M, TM),)
    kern = functools.partial(_pw_kernel, has_residual=residual is not None,
                             apply_relu=apply_relu)
    in_specs = [pl.BlockSpec((TM, Cin), lambda i: (i, 0)),
                pl.BlockSpec((Cin, Cout), lambda i: (0, 0)),
                pl.BlockSpec((1, Cout), lambda i: (0, 0))]
    args = [x2, w_scaled, bias]
    if residual is not None:
        in_specs.append(pl.BlockSpec((TM, Cout), lambda i: (i, 0)))
        args.append(residual)
    return pl.pallas_call(
        kern,
        out_shape=jax.ShapeDtypeStruct((M, Cout), jnp.float32),
        grid=grid,
        in_specs=in_specs,
        out_specs=pl.BlockSpec((TM, Cout), lambda i: (i, 0)),
        compiler_params=pltpu.CompilerParams(
            dimension_semantics=("parallel",),
            vmem_limit_bytes=VMEM_LIMIT),
    )(*args)


def conv3x3_bn_relu(x_nhwc, w2_scaled, bias, stride, max_tile_rows=512):
    """x: (N,H,W,Cin), w2_scaled: (3,3,Cin,Cout) -> (N,Ho,Wo,Cout)."""
    N, H, W, Cin = x_nhwc.shape
    Cout = w2_scaled.shape[-1]
    Ho = (H + 2 - 3) // stride + 1
    Wo = (W + 2 - 3) // stride + 1
    TH = _row_tile(Ho, Wo, max_tile_rows)
    T = Ho // TH
    w2f = w2_scaled.reshape(3, 3 * Cin, Cout)     # (kh, kw*Cin, Cout)
    kern = functools.partial(_conv3x3_kernel, H=H, W=W, stride=stride,
                             th=TH, wo=Wo)
    return pl.pallas_call(
        kern,
        out_shape=jax.ShapeDtypeStruct((N, Ho, Wo, Cout), jnp.float32),
        grid=(N, T),
        in_specs=[pl.BlockSpec((1, H, W, Cin), lambda n, t: (n, 0, 0, 0)),
                  pl.BlockSpec((3, 3 * Cin, Cout), lambda n, t: (0, 0, 0)),
                  pl.BlockSpec((1, Cout), lambda n, t: (0, 0))],
        out_specs=pl.BlockSpec((1, TH, Wo, Cout), lambda n, t: (n, t, 0, 0)),
        scratch_shapes=[pltpu.VMEM((H + 2, W + 2, Cin), jnp.float32)],
        compiler_params=pltpu.CompilerParams(
            # t must stay "arbitrary": the padded-image scratch is filled at
            # t == 0 and re-used by the following row tiles of the same image.
            dimension_semantics=("parallel", "arbitrary"),
            vmem_limit_bytes=VMEM_LIMIT),
    )(x_nhwc, w2f, bias)


def conv3_bn_shortcut(out2_nhwc, x_nhwc, w3s, b3, wss, bs, stride,
                      max_tile_rows=512):
    """Fused conv3 + bn3 + projection shortcut + add + relu."""
    N, Ho, Wo, planes = out2_nhwc.shape
    H, W, Cin = x_nhwc.shape[1], x_nhwc.shape[2], x_nhwc.shape[3]
    Cout = w3s.shape[-1]
    TH = _row_tile(Ho, Wo, max_tile_rows)
    T = Ho // TH
    kern = functools.partial(_conv3_proj_kernel, stride=stride, th=TH, wo=Wo)
    return pl.pallas_call(
        kern,
        out_shape=jax.ShapeDtypeStruct((N, Ho, Wo, Cout), jnp.float32),
        grid=(N, T),
        in_specs=[pl.BlockSpec((1, TH, Wo, planes), lambda n, t: (n, t, 0, 0)),
                  pl.BlockSpec((1, H, W, Cin), lambda n, t: (n, 0, 0, 0)),
                  pl.BlockSpec((planes, Cout), lambda n, t: (0, 0)),
                  pl.BlockSpec((1, Cout), lambda n, t: (0, 0)),
                  pl.BlockSpec((Cin, Cout), lambda n, t: (0, 0)),
                  pl.BlockSpec((1, Cout), lambda n, t: (0, 0))],
        out_specs=pl.BlockSpec((1, TH, Wo, Cout), lambda n, t: (n, t, 0, 0)),
        compiler_params=pltpu.CompilerParams(
            dimension_semantics=("parallel", "arbitrary"),
            vmem_limit_bytes=VMEM_LIMIT),
    )(out2_nhwc, x_nhwc, w3s, b3, wss, bs)


# --------------------------------------------------------------------------
# Parameters & forward
# --------------------------------------------------------------------------
def _fold_bn(gamma, beta, mean, var):
    scale = gamma / jnp.sqrt(var + EPS)
    bias = beta - mean * scale
    return scale.reshape(1, -1), bias.reshape(1, -1)


def init_params(key, in_planes, planes, stride):
    out_planes = EXPANSION * planes
    keys = jax.random.split(key, 8)

    def conv_w(k, kh, kw, cin, cout):
        # HWIO weight layout (synthetic deterministic init)
        return jax.random.normal(k, (kh, kw, cin, cout), jnp.float32) * 0.1

    def bn_p(k, c):
        k1, k2, k3, k4 = jax.random.split(k, 4)
        gamma = jax.random.uniform(k1, (c,), minval=0.5, maxval=1.5)
        beta = jax.random.normal(k2, (c,)) * 0.1
        mean = jax.random.normal(k3, (c,)) * 0.1
        var = jax.random.uniform(k4, (c,), minval=0.5, maxval=1.5)
        return (gamma, beta, mean, var)

    params = {
        "w1": conv_w(keys[0], 1, 1, in_planes, planes),
        "bn1": bn_p(keys[1], planes),
        "w2": conv_w(keys[2], 3, 3, planes, planes),
        "bn2": bn_p(keys[3], planes),
        "w3": conv_w(keys[4], 1, 1, planes, out_planes),
        "bn3": bn_p(keys[5], out_planes),
    }
    if stride != 1 or in_planes != out_planes:
        params["ws"] = conv_w(keys[6], 1, 1, in_planes, out_planes)
        params["bns"] = bn_p(keys[7], out_planes)
    return params


def bottleneck_forward(x_nchw, params, stride=1, max_tile_rows=512):
    # kernels run on NHWC; convert from/to PyTorch NCHW at the edges.
    x = jnp.transpose(x_nchw, (0, 2, 3, 1)).astype(jnp.float32)
    N, H, W, Cin = x.shape
    planes = params["w1"].shape[-1]
    out_planes = params["w3"].shape[-1]

    s1, b1 = _fold_bn(*params["bn1"])
    s2, b2 = _fold_bn(*params["bn2"])
    s3, b3 = _fold_bn(*params["bn3"])

    # Fold BN scale into the conv weights -> kernel epilogues are bias-only.
    w1s = params["w1"][0, 0] * s1                  # (Cin, planes)
    w2s = params["w2"] * s2                        # (3, 3, planes, planes)
    w3s = params["w3"][0, 0] * s3                  # (planes, out_planes)

    # conv1 (1x1) + bn1 + relu — row-tiled matmul
    x2 = x.reshape(N * H * W, Cin)
    out1 = pointwise_conv_bn(x2, w1s, b1, apply_relu=True)
    out1_nhwc = out1.reshape(N, H, W, planes)

    # conv2 (3x3, stride, pad=1) + bn2 + relu — spatially tiled, kw-fused,
    # zero-padding built in VMEM.
    out2_nhwc = conv3x3_bn_relu(out1_nhwc, w2s, b2, stride, max_tile_rows)
    _, Ho, Wo, _ = out2_nhwc.shape

    if "ws" in params:
        # projection shortcut fused into the final kernel (strided subsample
        # done in-kernel, no HBM intermediates).
        ss, bs = _fold_bn(*params["bns"])
        wss = params["ws"][0, 0] * ss
        out_nhwc = conv3_bn_shortcut(out2_nhwc, x, w3s, b3, wss, bs, stride,
                                     max_tile_rows)
    else:
        # identity shortcut: residual add fused into the pointwise kernel.
        out = pointwise_conv_bn(out2_nhwc.reshape(N * Ho * Wo, planes),
                                w3s, b3, residual=x2, apply_relu=True)
        out_nhwc = out.reshape(N, Ho, Wo, out_planes)

    return jnp.transpose(out_nhwc, (0, 3, 1, 2))   # back to NCHW


# --------------------------------------------------------------------------
# Pure-JAX reference (for correctness check)
# --------------------------------------------------------------------------
def reference_forward(x_nchw, params, stride=1):
    x = jnp.transpose(x_nchw, (0, 2, 3, 1)).astype(jnp.float32)

    def conv(z, w, s, pad):
        return jax.lax.conv_general_dilated(
            z, w, window_strides=(s, s), padding=pad,
            dimension_numbers=("NHWC", "HWIO", "NHWC"))

    def bn(z, p):
        gamma, beta, mean, var = p
        return (z - mean) / jnp.sqrt(var + EPS) * gamma + beta

    out = jax.nn.relu(bn(conv(x, params["w1"], 1, "VALID"), params["bn1"]))
    out = jax.nn.relu(bn(conv(out, params["w2"], stride, [(1, 1), (1, 1)]),
                         params["bn2"]))
    out = bn(conv(out, params["w3"], 1, "VALID"), params["bn3"])
    if "ws" in params:
        sc = bn(conv(x, params["ws"], stride, "VALID"), params["bns"])
    else:
        sc = x
    out = jax.nn.relu(out + sc)
    return jnp.transpose(out, (0, 3, 1, 2))


if __name__ == "__main__":
    key = jax.random.PRNGKey(0)
    configs = [
        # (in_planes, planes, stride, H, W, max_tile_rows)
        (4, 4, 1, 16, 16, 512),    # projection shortcut (channel expand), stride 1
        (16, 4, 1, 16, 16, 512),   # identity shortcut
        (4, 4, 2, 16, 16, 512),    # projection shortcut, stride 2
        (4, 4, 1, 16, 16, 64),     # forces multiple spatial row tiles
    ]
    for idx, (cin, planes, stride, H, W, mtr) in enumerate(configs):
        kx, kp, key = jax.random.split(key, 3)
        x = jax.random.normal(kx, (2, cin, H, W), jnp.float32)   # NCHW input
        params = init_params(kp, cin, planes, stride)

        out = jax.block_until_ready(bottleneck_forward(x, params, stride, mtr))
        ref = jax.block_until_ready(reference_forward(x, params, stride))

        assert out.shape == ref.shape, (idx, out.shape, ref.shape)
        err = float(jnp.max(jnp.abs(out - ref)))
        if err > 1e-3:
            raise AssertionError(f"config {idx}: Pallas mismatch vs reference: {err}")
    print("KERNEL_OK")
</pallas_src>

<mosaic_0001>
module attributes {stable_mosaic.version = 11 : i64} {
  func.func @_pw_kernel(%arg0: i32, %arg1: memref<512x4xf32, #tpu.memory_space<vmem>>, %arg2: memref<4x4xf32, #tpu.memory_space<vmem>>, %arg3: memref<1x4xf32, #tpu.memory_space<vmem>>, %arg4: memref<512x4xf32, #tpu.memory_space<vmem>>) attributes {dimension_semantics = [#tpu.dimension_semantics<parallel>], iteration_bounds = array<i64: 1>, scalar_prefetch = 0 : i64, scratch_operands = 0 : i64, tpu.core_type = #tpu.core_type<tc>, window_params = [{transform_indices = @transform_0, window_bounds = array<i64: 512, 4>}, {pipeline_mode = #tpu.pipeline_mode<synchronous>, transform_indices = @transform_1, window_bounds = array<i64: 4, 4>}, {pipeline_mode = #tpu.pipeline_mode<synchronous>, transform_indices = @transform_2, window_bounds = array<i64: 1, 4>}, {transform_indices = @transform_3, window_bounds = array<i64: 512, 4>}]} {
    %c0 = arith.constant 0 : index
    %c0_0 = arith.constant 0 : index
    %0 = vector.load %arg1[%c0, %c0_0] : memref<512x4xf32, #tpu.memory_space<vmem>>, vector<512x4xf32>
    %c0_1 = arith.constant 0 : index
    %c0_2 = arith.constant 0 : index
    %1 = vector.load %arg2[%c0_1, %c0_2] : memref<4x4xf32, #tpu.memory_space<vmem>>, vector<4x4xf32>
    %cst = arith.constant dense<0.000000e+00> : vector<512x4xf32>
    %2 = tpu.matmul %0, %1, %cst {dimension_numbers = #tpu.dot_dimension_numbers<[1], [0], [0], [1], [0, 0, 1, 1], [], []>} : vector<512x4xf32>, vector<4x4xf32>, vector<512x4xf32> -> vector<512x4xf32>
    %c0_3 = arith.constant 0 : index
    %c0_4 = arith.constant 0 : index
    %3 = vector.load %arg3[%c0_3, %c0_4] : memref<1x4xf32, #tpu.memory_space<vmem>>, vector<1x4xf32>
    %4 = vector.broadcast %3 : vector<1x4xf32> to vector<512x4xf32>
    %5 = arith.addf %2, %4 : vector<512x4xf32>
    %cst_5 = arith.constant 0.000000e+00 : f32
    %6 = vector.broadcast %cst_5 : f32 to vector<512x4xf32>
    %7 = arith.maximumf %5, %6 : vector<512x4xf32>
    %c0_6 = arith.constant 0 : index
    %c0_7 = arith.constant 0 : index
    %8 = vector.load %arg4[%c0_6, %c0_7] : memref<512x4xf32, #tpu.memory_space<vmem>>, vector<512x4xf32>
    tpu.vector_store %arg4[%c0_6, %c0_7], %7 {strides = array<i32>} : memref<512x4xf32, #tpu.memory_space<vmem>>, vector<512x4xf32>,
    return
  }
  func.func @transform_0(%arg0: i32) -> (i32, i32) {
    %c0_i32 = arith.constant 0 : i32
    %c0_i32_0 = arith.constant 0 : i32
    return %arg0, %c0_i32 : i32, i32
  }
  func.func @transform_1(%arg0: i32) -> (i32, i32) {
    %c0_i32 = arith.constant 0 : i32
    %c0_i32_0 = arith.constant 0 : i32
    %c0_i32_1 = arith.constant 0 : i32
    return %c0_i32, %c0_i32_0 : i32, i32
  }
  func.func @transform_2(%arg0: i32) -> (i32, i32) {
    %c0_i32 = arith.constant 0 : i32
    %c0_i32_0 = arith.constant 0 : i32
    %c0_i32_1 = arith.constant 0 : i32
    return %c0_i32, %c0_i32_0 : i32, i32
  }
  func.func @transform_3(%arg0: i32) -> (i32, i32) {
    %c0_i32 = arith.constant 0 : i32
    %c0_i32_0 = arith.constant 0 : i32
    return %arg0, %c0_i32 : i32, i32
  }
}

</mosaic_0001>

<llo_original>
// kernel: tpu_custom_call.1
$region0: #{tpu_custom_call.1}
  #allocation0 [shape = 'u32[]', space=smem, size = 0x4, offset = 0x4, fixed_abs, tag = 'smem constant byte address 0x4 - core index']
  #allocation1 [shape = 'u32[144,128]{1,0:T(1,128)}', space=vmem, size = 0x12000, scoped, tag = 'internal scratch']
  %s0 = inlined_call_operand.vmem [shape: f32[512,4], index: 0, kind: input, shape index: {}]
  %s1 = inlined_call_operand.vmem [shape: f32[4,4], index: 1, kind: input, shape index: {}]
  %s2 = inlined_call_operand.vmem [shape: f32[1,4], index: 2, kind: input, shape index: {}]
  %s3 = inlined_call_operand.vmem [shape: f32[512,4], index: 3, kind: output, shape index: {}]
  %s4 = sld [smem:[#allocation0]]
  $region22: #{tpu_custom_call.1} parent=0
    _
  %s6 = ssub.s32 1, %s4
  %s7 = scalar_select 0, %s6, %s4
  // Predicated region
  $region2: #{tpu_custom_call.1} parent=0 // pred_check
    _
  $region3: #{tpu_custom_call.1} parent=0 // pred_check_branch
    %9 = sbr.rel (0) target = $region5
  $region4: #{tpu_custom_call.1} parent=0 // pred_region
    _
  $region5: #{tpu_custom_call.1} parent=0 // pred_fallthru
    _
  // Predicated region
  $region6: #{tpu_custom_call.1} parent=0 // pred_check
    _
  $region7: #{tpu_custom_call.1} parent=0 // pred_check_branch
    %11 = sbr.rel (0) target = $region9
  $region8: #{tpu_custom_call.1} parent=0 // pred_region
    _
  $region9: #{tpu_custom_call.1} parent=0 // pred_fallthru
    _
  // Predicated region
  $region10: #{tpu_custom_call.1} parent=0 // pred_check
    _
  $region11: #{tpu_custom_call.1} parent=0 // pred_check_branch
    %13 = sbr.rel (0) target = $region13
  $region12: #{tpu_custom_call.1} parent=0 // pred_region
    _
  $region13: #{tpu_custom_call.1} parent=0 // pred_fallthru
    _
  %v14 = vld [vmem:[%s0] sm:$0xff]
  %v15 = vld [vmem:[%s0 + $0x8] sm:$0xff]
  %v16 = vld [vmem:[%s0 + $0x10] sm:$0xff]
  %v17 = vld [vmem:[%s0 + $0x18] sm:$0xff]
  %v18 = vld [vmem:[%s0 + $0x20] sm:$0xff]
  %v19 = vld [vmem:[%s0 + $0x28] sm:$0xff]
  %v20 = vld [vmem:[%s0 + $0x30] sm:$0xff]
  %v21 = vld [vmem:[%s0 + $0x38] sm:$0xff]
  %v22 = vld [vmem:[%s0 + $0x40] sm:$0xff]
  %v23 = vld [vmem:[%s0 + $0x48] sm:$0xff]
  %v24 = vld [vmem:[%s0 + $0x50] sm:$0xff]
  %v25 = vld [vmem:[%s0 + $0x58] sm:$0xff]
  %v26 = vld [vmem:[%s0 + $0x60] sm:$0xff]
  %v27 = vld [vmem:[%s0 + $0x68] sm:$0xff]
  %v28 = vld [vmem:[%s0 + $0x70] sm:$0xff]
  %v29 = vld [vmem:[%s0 + $0x78] sm:$0xff]
  %v30 = vld [vmem:[%s0 + $0x80] sm:$0xff]
  %v31 = vld [vmem:[%s0 + $0x88] sm:$0xff]
  %v32 = vld [vmem:[%s0 + $0x90] sm:$0xff]
  %v33 = vld [vmem:[%s0 + $0x98] sm:$0xff]
  %v34 = vld [vmem:[%s0 + $0xa0] sm:$0xff]
  %v35 = vld [vmem:[%s0 + $0xa8] sm:$0xff]
  %v36 = vld [vmem:[%s0 + $0xb0] sm:$0xff]
  %v37 = vld [vmem:[%s0 + $0xb8] sm:$0xff]
  %v38 = vld [vmem:[%s0 + $0xc0] sm:$0xff]
  %v39 = vld [vmem:[%s0 + $0xc8] sm:$0xff]
  %v40 = vld [vmem:[%s0 + $0xd0] sm:$0xff]
  %v41 = vld [vmem:[%s0 + $0xd8] sm:$0xff]
  %v42 = vld [vmem:[%s0 + $0xe0] sm:$0xff]
  %v43 = vld [vmem:[%s0 + $0xe8] sm:$0xff]
  %v44 = vld [vmem:[%s0 + $0xf0] sm:$0xff]
  %v45 = vld [vmem:[%s0 + $0xf8] sm:$0xff]
  %v46 = vld [vmem:[%s0 + $0x100] sm:$0xff]
  %v47 = vld [vmem:[%s0 + $0x108] sm:$0xff]
  %v48 = vld [vmem:[%s0 + $0x110] sm:$0xff]
  %v49 = vld [vmem:[%s0 + $0x118] sm:$0xff]
  %v50 = vld [vmem:[%s0 + $0x120] sm:$0xff]
  %v51 = vld [vmem:[%s0 + $0x128] sm:$0xff]
  %v52 = vld [vmem:[%s0 + $0x130] sm:$0xff]
  %v53 = vld [vmem:[%s0 + $0x138] sm:$0xff]
  %v54 = vld [vmem:[%s0 + $0x140] sm:$0xff]
  %v55 = vld [vmem:[%s0 + $0x148] sm:$0xff]
  %v56 = vld [vmem:[%s0 + $0x150] sm:$0xff]
  %v57 = vld [vmem:[%s0 + $0x158] sm:$0xff]
  %v58 = vld [vmem:[%s0 + $0x160] sm:$0xff]
  %v59 = vld [vmem:[%s0 + $0x168] sm:$0xff]
  %v60 = vld [vmem:[%s0 + $0x170] sm:$0xff]
  %v61 = vld [vmem:[%s0 + $0x178] sm:$0xff]
  %v62 = vld [vmem:[%s0 + $0x180] sm:$0xff]
  %v63 = vld [vmem:[%s0 + $0x188] sm:$0xff]
  %v64 = vld [vmem:[%s0 + $0x190] sm:$0xff]
  %v65 = vld [vmem:[%s0 + $0x198] sm:$0xff]
  %v66 = vld [vmem:[%s0 + $0x1a0] sm:$0xff]
  %v67 = vld [vmem:[%s0 + $0x1a8] sm:$0xff]
  %v68 = vld [vmem:[%s0 + $0x1b0] sm:$0xff]
  %v69 = vld [vmem:[%s0 + $0x1b8] sm:$0xff]
  %v70 = vld [vmem:[%s0 + $0x1c0] sm:$0xff]
  %v71 = vld [vmem:[%s0 + $0x1c8] sm:$0xff]
  %v72 = vld [vmem:[%s0 + $0x1d0] sm:$0xff]
  %v73 = vld [vmem:[%s0 + $0x1d8] sm:$0xff]
  %v74 = vld [vmem:[%s0 + $0x1e0] sm:$0xff]
  %v75 = vld [vmem:[%s0 + $0x1e8] sm:$0xff]
  %v76 = vld [vmem:[%s0 + $0x1f0] sm:$0xff]
  %v77 = vld [vmem:[%s0 + $0x1f8] sm:$0xff]
  %v78 = vld [vmem:[%s1] sm:$0xf]
  %v79 = vld [vmem:[%s2] sm:$0x1]
  %v81 = vlaneseq
  %v82 = vshrl.u32 %v81, 7
  %v83 = vsub.s32 0, %v82
  %v84 = vrot.slane %v79, %v83
  %vm86 = vcmask 31744
  %v88 = vsel %vm86, %v14, 0
  %v91 = vsel %vm86, %v15, 0
  %v94 = vsel %vm86, %v16, 0
  %v97 = vsel %vm86, %v17, 0
  %v100 = vsel %vm86, %v18, 0
  %v103 = vsel %vm86, %v19, 0
  %v106 = vsel %vm86, %v20, 0
  %v109 = vsel %vm86, %v21, 0
  %v112 = vsel %vm86, %v22, 0
  %v115 = vsel %vm86, %v23, 0
  %v118 = vsel %vm86, %v24, 0
  %v121 = vsel %vm86, %v25, 0
  %v124 = vsel %vm86, %v26, 0
  %v127 = vsel %vm86, %v27, 0
  %v130 = vsel %vm86, %v28, 0
  %v133 = vsel %vm86, %v29, 0
  %v136 = vsel %vm86, %v30, 0
  %v139 = vsel %vm86, %v31, 0
  %v142 = vsel %vm86, %v32, 0
  %v145 = vsel %vm86, %v33, 0
  %v148 = vsel %vm86, %v34, 0
  %v151 = vsel %vm86, %v35, 0
  %v154 = vsel %vm86, %v36, 0
  %v157 = vsel %vm86, %v37, 0
  %v160 = vsel %vm86, %v38, 0
  %v163 = vsel %vm86, %v39, 0
  %v166 = vsel %vm86, %v40, 0
  %v169 = vsel %vm86, %v41, 0
  %v172 = vsel %vm86, %v42, 0
  %v175 = vsel %vm86, %v43, 0
  %v178 = vsel %vm86, %v44, 0
  %v181 = vsel %vm86, %v45, 0
  %v184 = vsel %vm86, %v46, 0
  %v187 = vsel %vm86, %v47, 0
  %v190 = vsel %vm86, %v48, 0
  %v193 = vsel %vm86, %v49, 0
  %v196 = vsel %vm86, %v50, 0
  %v199 = vsel %vm86, %v51, 0
  %v202 = vsel %vm86, %v52, 0
  %v205 = vsel %vm86, %v53, 0
  %v208 = vsel %vm86, %v54, 0
  %v211 = vsel %vm86, %v55, 0
  %v214 = vsel %vm86, %v56, 0
  %v217 = vsel %vm86, %v57, 0
  %v220 = vsel %vm86, %v58, 0
  %v223 = vsel %vm86, %v59, 0
  %v226 = vsel %vm86, %v60, 0
  %v229 = vsel %vm86, %v61, 0
  %v232 = vsel %vm86, %v62, 0
  %v235 = vsel %vm86, %v63, 0
  %v238 = vsel %vm86, %v64, 0
  %v241 = vsel %vm86, %v65, 0
  %v244 = vsel %vm86, %v66, 0
  %v247 = vsel %vm86, %v67, 0
  %v250 = vsel %vm86, %v68, 0
  %v253 = vsel %vm86, %v69, 0
  %v256 = vsel %vm86, %v70, 0
  %v259 = vsel %vm86, %v71, 0
  %v262 = vsel %vm86, %v72, 0
  %v265 = vsel %vm86, %v73, 0
  %v268 = vsel %vm86, %v74, 0
  %v271 = vsel %vm86, %v75, 0
  %v274 = vsel %vm86, %v76, 0
  %v277 = vsel %vm86, %v77, 0
  %vm279 = vcmask 1043456
  %v281 = vsel %vm279, %v78, 0
  %283 = vmatprep.subr.mxu0 0.0
  %284 = vmatpush1.msra.mxu0 0.0
  %285 = vmatprep.subr.mxu0 0.0
  %286 = vmatpush1.msra.mxu0 0.0
  %287 = vmatprep.subr.mxu0 0.0
  %288 = vmatpush1.msra.mxu0 0.0
  %289 = vmatprep.subr.mxu0 0.0
  %290 = vmatpush1.msra.mxu0 0.0
  %291 = vmatprep.subr.mxu0 0.0
  %292 = vmatpush1.msra.mxu0 0.0
  %293 = vmatprep.subr.mxu0 0.0
  %294 = vmatpush1.msra.mxu0 0.0
  %295 = vmatprep.subr.mxu0 0.0
  %296 = vmatpush1.msra.mxu0 0.0
  %297 = vmatprep.subr.mxu0 0.0
  %298 = vmatpush1.msra.mxu0 0.0
  %299 = vmatprep.subr.mxu0 0.0
  %300 = vmatpush1.msra.mxu0 0.0
  %301 = vmatprep.subr.mxu0 0.0
  %302 = vmatpush1.msra.mxu0 0.0
  %303 = vmatprep.subr.mxu0 0.0
  %304 = vmatpush1.msra.mxu0 0.0
  %305 = vmatprep.subr.mxu0 0.0
  %306 = vmatpush1.msra.mxu0 0.0
  %307 = vmatprep.subr.mxu0 0.0
  %308 = vmatpush1.msra.mxu0 0.0
  %309 = vmatprep.subr.mxu0 0.0
  %310 = vmatpush1.msra.mxu0 0.0
  %311 = vmatprep.subr.mxu0 0.0
  %312 = vmatpush1.msra.mxu0 0.0
  %313 = vmatprep.subr.mxu0 0.0
  %314 = vmatpush1.msra.mxu0 %v281
  %315 = vmatprep.subr.mxu0 0.0
  %316 = vmatpush2.msra.mxu0 0.0
  %317 = vmatprep.subr.mxu0 0.0
  %318 = vmatpush2.msra.mxu0 0.0
  %319 = vmatprep.subr.mxu0 0.0
  %320 = vmatpush2.msra.mxu0 0.0
  %321 = vmatprep.subr.mxu0 0.0
  %322 = vmatpush2.msra.mxu0 0.0
  %323 = vmatprep.subr.mxu0 0.0
  %324 = vmatpush2.msra.mxu0 0.0
  %325 = vmatprep.subr.mxu0 0.0
  %326 = vmatpush2.msra.mxu0 0.0
  %327 = vmatprep.subr.mxu0 0.0
  %328 = vmatpush2.msra.mxu0 0.0
  %329 = vmatprep.subr.mxu0 0.0
  %330 = vmatpush2.msra.mxu0 0.0
  %331 = vmatprep.subr.mxu0 0.0
  %332 = vmatpush2.msra.mxu0 0.0
  %333 = vmatprep.subr.mxu0 0.0
  %334 = vmatpush2.msra.mxu0 0.0
  %335 = vmatprep.subr.mxu0 0.0
  %336 = vmatpush2.msra.mxu0 0.0
  %337 = vmatprep.subr.mxu0 0.0
  %338 = vmatpush2.msra.mxu0 0.0
  %339 = vmatprep.subr.mxu0 0.0
  %340 = vmatpush2.msra.mxu0 0.0
  %341 = vmatprep.subr.mxu0 0.0
  %342 = vmatpush2.msra.mxu0 0.0
  %343 = vmatprep.subr.mxu0 0.0
  %344 = vmatpush2.msra.mxu0 0.0
  %345 = vmatprep.subr.mxu0 0.0
  %346 = vmatpush2.msra.mxu0 0.0
  %347 = vmatprep.mubr.f32.mxu0 0.0
  %348 = vmatmul.mubr.f32.gmra.mxu0 %v88
  %v349 = vpop.f32.mrf.mxu0
  %v350 = vadd.f32 %v84, %v349
  %v351 = vpop.f32.mrf.mxu0
  %352 = vmatprep.mubr.f32.mxu0 0.0
  %353 = vmatmul.mubr.f32.gmra.mxu0 %v91
  %v354 = vpop.f32.mrf.mxu0
  %v355 = vadd.f32 %v84, %v354
  %v356 = vpop.f32.mrf.mxu0
  %357 = vmatprep.mubr.f32.mxu0 0.0
  %358 = vmatmul.mubr.f32.gmra.mxu0 %v94
  %v359 = vpop.f32.mrf.mxu0
  %v360 = vadd.f32 %v84, %v359
  %v361 = vpop.f32.mrf.mxu0
  %362 = vmatprep.mubr.f32.mxu0 0.0
  %363 = vmatmul.mubr.f32.gmra.mxu0 %v97
  %v364 = vpop.f32.mrf.mxu0
  %v365 = vadd.f32 %v84, %v364
  %v366 = vpop.f32.mrf.mxu0
  %367 = vmatprep.mubr.f32.mxu0 0.0
  %368 = vmatmul.mubr.f32.gmra.mxu0 %v100
  %v369 = vpop.f32.mrf.mxu0
  %v370 = vadd.f32 %v84, %v369
  %v371 = vpop.f32.mrf.mxu0
  %372 = vmatprep.mubr.f32.mxu0 0.0
  %373 = vmatmul.mubr.f32.gmra.mxu0 %v103
  %v374 = vpop.f32.mrf.mxu0
  %v375 = vadd.f32 %v84, %v374
  %v376 = vpop.f32.mrf.mxu0
  %377 = vmatprep.mubr.f32.mxu0 0.0
  %378 = vmatmul.mubr.f32.gmra.mxu0 %v106
  %v379 = vpop.f32.mrf.mxu0
  %v380 = vadd.f32 %v84, %v379
  %v381 = vpop.f32.mrf.mxu0
  %382 = vmatprep.mubr.f32.mxu0 0.0
  %383 = vmatmul.mubr.f32.gmra.mxu0 %v109
  %v384 = vpop.f32.mrf.mxu0
  %v385 = vadd.f32 %v84, %v384
  %v386 = vpop.f32.mrf.mxu0
  %387 = vmatprep.mubr.f32.mxu0 0.0
  %388 = vmatmul.mubr.f32.gmra.mxu0 %v112
  %v389 = vpop.f32.mrf.mxu0
  %v390 = vadd.f32 %v84, %v389
  %v391 = vpop.f32.mrf.mxu0
  %392 = vmatprep.mubr.f32.mxu0 0.0
  %393 = vmatmul.mubr.f32.gmra.mxu0 %v115
  %v394 = vpop.f32.mrf.mxu0
  %v395 = vadd.f32 %v84, %v394
  %v396 = vpop.f32.mrf.mxu0
  %397 = vmatprep.mubr.f32.mxu0 0.0
  %398 = vmatmul.mubr.f32.gmra.mxu0 %v118
  %v399 = vpop.f32.mrf.mxu0
  %v400 = vadd.f32 %v84, %v399
  %v401 = vpop.f32.mrf.mxu0
  %402 = vmatprep.mubr.f32.mxu0 0.0
  %403 = vmatmul.mubr.f32.gmra.mxu0 %v121
  %v404 = vpop.f32.mrf.mxu0
  %v405 = vadd.f32 %v84, %v404
  %v406 = vpop.f32.mrf.mxu0
  %407 = vmatprep.mubr.f32.mxu0 0.0
  %408 = vmatmul.mubr.f32.gmra.mxu0 %v124
  %v409 = vpop.f32.mrf.mxu0
  %v410 = vadd.f32 %v84, %v409
  %v411 = vpop.f32.mrf.mxu0
  %412 = vmatprep.mubr.f32.mxu0 0.0
  %413 = vmatmul.mubr.f32.gmra.mxu0 %v127
  %v414 = vpop.f32.mrf.mxu0
  %v415 = vadd.f32 %v84, %v414
  %v416 = vpop.f32.mrf.mxu0
  %417 = vmatprep.mubr.f32.mxu0 0.0
  %418 = vmatmul.mubr.f32.gmra.mxu0 %v130
  %v419 = vpop.f32.mrf.mxu0
  %v420 = vadd.f32 %v84, %v419
  %v421 = vpop.f32.mrf.mxu0
  %422 = vmatprep.mubr.f32.mxu0 0.0
  %423 = vmatmul.mubr.f32.gmra.mxu0 %v133
  %v424 = vpop.f32.mrf.mxu0
  %v425 = vadd.f32 %v84, %v424
  %v426 = vpop.f32.mrf.mxu0
  %427 = vmatprep.mubr.f32.mxu0 0.0
  %428 = vmatmul.mubr.f32.gmra.mxu0 %v136
  %v429 = vpop.f32.mrf.mxu0
  %v430 = vadd.f32 %v84, %v429
  %v431 = vpop.f32.mrf.mxu0
  %432 = vmatprep.mubr.f32.mxu0 0.0
  %433 = vmatmul.mubr.f32.gmra.mxu0 %v139
  %v434 = vpop.f32.mrf.mxu0
  %v435 = vadd.f32 %v84, %v434
  %v436 = vpop.f32.mrf.mxu0
  %437 = vmatprep.mubr.f32.mxu0 0.0
  %438 = vmatmul.mubr.f32.gmra.mxu0 %v142
  %v439 = vpop.f32.mrf.mxu0
  %v440 = vadd.f32 %v84, %v439
  %v441 = vpop.f32.mrf.mxu0
  %442 = vmatprep.mubr.f32.mxu0 0.0
  %443 = vmatmul.mubr.f32.gmra.mxu0 %v145
  %v444 = vpop.f32.mrf.mxu0
  %v445 = vadd.f32 %v84, %v444
  %v446 = vpop.f32.mrf.mxu0
  %447 = vmatprep.mubr.f32.mxu0 0.0
  %448 = vmatmul.mubr.f32.gmra.mxu0 %v148
  %v449 = vpop.f32.mrf.mxu0
  %v450 = vadd.f32 %v84, %v449
  %v451 = vpop.f32.mrf.mxu0
  %452 = vmatprep.mubr.f32.mxu0 0.0
  %453 = vmatmul.mubr.f32.gmra.mxu0 %v151
  %v454 = vpop.f32.mrf.mxu0
  %v455 = vadd.f32 %v84, %v454
  %v456 = vpop.f32.mrf.mxu0
  %457 = vmatprep.mubr.f32.mxu0 0.0
  %458 = vmatmul.mubr.f32.gmra.mxu0 %v154
  %v459 = vpop.f32.mrf.mxu0
  %v460 = vadd.f32 %v84, %v459
  %v461 = vpop.f32.mrf.mxu0
  %462 = vmatprep.mubr.f32.mxu0 0.0
  %463 = vmatmul.mubr.f32.gmra.mxu0 %v157
  %v464 = vpop.f32.mrf.mxu0
  %v465 = vadd.f32 %v84, %v464
  %v466 = vpop.f32.mrf.mxu0
  %467 = vmatprep.mubr.f32.mxu0 0.0
  %468 = vmatmul.mubr.f32.gmra.mxu0 %v160
  %v469 = vpop.f32.mrf.mxu0
  %v470 = vadd.f32 %v84, %v469
  %v471 = vpop.f32.mrf.mxu0
  %472 = vmatprep.mubr.f32.mxu0 0.0
  %473 = vmatmul.mubr.f32.gmra.mxu0 %v163
  %v474 = vpop.f32.mrf.mxu0
  %v475 = vadd.f32 %v84, %v474
  %v476 = vpop.f32.mrf.mxu0
  %477 = vmatprep.mubr.f32.mxu0 0.0
  %478 = vmatmul.mubr.f32.gmra.mxu0 %v166
  %v479 = vpop.f32.mrf.mxu0
  %v480 = vadd.f32 %v84, %v479
  %v481 = vpop.f32.mrf.mxu0
  %482 = vmatprep.mubr.f32.mxu0 0.0
  %483 = vmatmul.mubr.f32.gmra.mxu0 %v169
  %v484 = vpop.f32.mrf.mxu0
  %v485 = vadd.f32 %v84, %v484
  %v486 = vpop.f32.mrf.mxu0
  %487 = vmatprep.mubr.f32.mxu0 0.0
  %488 = vmatmul.mubr.f32.gmra.mxu0 %v172
  %v489 = vpop.f32.mrf.mxu0
  %v490 = vadd.f32 %v84, %v489
  %v491 = vpop.f32.mrf.mxu0
  %492 = vmatprep.mubr.f32.mxu0 0.0
  %493 = vmatmul.mubr.f32.gmra.mxu0 %v175
  %v494 = vpop.f32.mrf.mxu0
  %v495 = vadd.f32 %v84, %v494
  %v496 = vpop.f32.mrf.mxu0
  %497 = vmatprep.mubr.f32.mxu0 0.0
  %498 = vmatmul.mubr.f32.gmra.mxu0 %v178
  %v499 = vpop.f32.mrf.mxu0
  %v500 = vadd.f32 %v84, %v499
  %v501 = vpop.f32.mrf.mxu0
  %502 = vmatprep.mubr.f32.mxu0 0.0
  %503 = vmatmul.mubr.f32.gmra.mxu0 %v181
  %v504 = vpop.f32.mrf.mxu0
  %v505 = vadd.f32 %v84, %v504
  %v506 = vpop.f32.mrf.mxu0
  %507 = vmatprep.mubr.f32.mxu0 0.0
  %508 = vmatmul.mubr.f32.gmra.mxu0 %v184
  %v509 = vpop.f32.mrf.mxu0
  %v510 = vadd.f32 %v84, %v509
  %v511 = vpop.f32.mrf.mxu0
  %512 = vmatprep.mubr.f32.mxu0 0.0
  %513 = vmatmul.mubr.f32.gmra.mxu0 %v187
  %v514 = vpop.f32.mrf.mxu0
  %v515 = vadd.f32 %v84, %v514
  %v516 = vpop.f32.mrf.mxu0
  %517 = vmatprep.mubr.f32.mxu0 0.0
  %518 = vmatmul.mubr.f32.gmra.mxu0 %v190
  %v519 = vpop.f32.mrf.mxu0
  %v520 = vadd.f32 %v84, %v519
  %v521 = vpop.f32.mrf.mxu0
  %522 = vmatprep.mubr.f32.mxu0 0.0
  %523 = vmatmul.mubr.f32.gmra.mxu0 %v193
  %v524 = vpop.f32.mrf.mxu0
  %v525 = vadd.f32 %v84, %v524
  %v526 = vpop.f32.mrf.mxu0
  %527 = vmatprep.mubr.f32.mxu0 0.0
  %528 = vmatmul.mubr.f32.gmra.mxu0 %v196
  %v529 = vpop.f32.mrf.mxu0
  %v530 = vadd.f32 %v84, %v529
  %v531 = vpop.f32.mrf.mxu0
  %532 = vmatprep.mubr.f32.mxu0 0.0
  %533 = vmatmul.mubr.f32.gmra.mxu0 %v199
  %v534 = vpop.f32.mrf.mxu0
  %v535 = vadd.f32 %v84, %v534
  %v536 = vpop.f32.mrf.mxu0
  %537 = vmatprep.mubr.f32.mxu0 0.0
  %538 = vmatmul.mubr.f32.gmra.mxu0 %v202
  %v539 = vpop.f32.mrf.mxu0
  %v540 = vadd.f32 %v84, %v539
  %v541 = vpop.f32.mrf.mxu0
  %542 = vmatprep.mubr.f32.mxu0 0.0
  %543 = vmatmul.mubr.f32.gmra.mxu0 %v205
  %v544 = vpop.f32.mrf.mxu0
  %v545 = vadd.f32 %v84, %v544
  %v546 = vpop.f32.mrf.mxu0
  %547 = vmatprep.mubr.f32.mxu0 0.0
  %548 = vmatmul.mubr.f32.gmra.mxu0 %v208
  %v549 = vpop.f32.mrf.mxu0
  %v550 = vadd.f32 %v84, %v549
  %v551 = vpop.f32.mrf.mxu0
  %552 = vmatprep.mubr.f32.mxu0 0.0
  %553 = vmatmul.mubr.f32.gmra.mxu0 %v211
  %v554 = vpop.f32.mrf.mxu0
  %v555 = vadd.f32 %v84, %v554
  %v556 = vpop.f32.mrf.mxu0
  %557 = vmatprep.mubr.f32.mxu0 0.0
  %558 = vmatmul.mubr.f32.gmra.mxu0 %v214
  %v559 = vpop.f32.mrf.mxu0
  %v560 = vadd.f32 %v84, %v559
  %v561 = vpop.f32.mrf.mxu0
  %562 = vmatprep.mubr.f32.mxu0 0.0
  %563 = vmatmul.mubr.f32.gmra.mxu0 %v217
  %v564 = vpop.f32.mrf.mxu0
  %v565 = vadd.f32 %v84, %v564
  %v566 = vpop.f32.mrf.mxu0
  %567 = vmatprep.mubr.f32.mxu0 0.0
  %568 = vmatmul.mubr.f32.gmra.mxu0 %v220
  %v569 = vpop.f32.mrf.mxu0
  %v570 = vadd.f32 %v84, %v569
  %v571 = vpop.f32.mrf.mxu0
  %572 = vmatprep.mubr.f32.mxu0 0.0
  %573 = vmatmul.mubr.f32.gmra.mxu0 %v223
  %v574 = vpop.f32.mrf.mxu0
  %v575 = vadd.f32 %v84, %v574
  %v576 = vpop.f32.mrf.mxu0
  %577 = vmatprep.mubr.f32.mxu0 0.0
  %578 = vmatmul.mubr.f32.gmra.mxu0 %v226
  %v579 = vpop.f32.mrf.mxu0
  %v580 = vadd.f32 %v84, %v579
  %v581 = vpop.f32.mrf.mxu0
  %582 = vmatprep.mubr.f32.mxu0 0.0
  %583 = vmatmul.mubr.f32.gmra.mxu0 %v229
  %v584 = vpop.f32.mrf.mxu0
  %v585 = vadd.f32 %v84, %v584
  %v586 = vpop.f32.mrf.mxu0
  %587 = vmatprep.mubr.f32.mxu0 0.0
  %588 = vmatmul.mubr.f32.gmra.mxu0 %v232
  %v589 = vpop.f32.mrf.mxu0
  %v590 = vadd.f32 %v84, %v589
  %v591 = vpop.f32.mrf.mxu0
  %592 = vmatprep.mubr.f32.mxu0 0.0
  %593 = vmatmul.mubr.f32.gmra.mxu0 %v235
  %v594 = vpop.f32.mrf.mxu0
  %v595 = vadd.f32 %v84, %v594
  %v596 = vpop.f32.mrf.mxu0
  %597 = vmatprep.mubr.f32.mxu0 0.0
  %598 = vmatmul.mubr.f32.gmra.mxu0 %v238
  %v599 = vpop.f32.mrf.mxu0
  %v600 = vadd.f32 %v84, %v599
  %v601 = vpop.f32.mrf.mxu0
  %602 = vmatprep.mubr.f32.mxu0 0.0
  %603 = vmatmul.mubr.f32.gmra.mxu0 %v241
  %v604 = vpop.f32.mrf.mxu0
  %v605 = vadd.f32 %v84, %v604
  %v606 = vpop.f32.mrf.mxu0
  %607 = vmatprep.mubr.f32.mxu0 0.0
  %608 = vmatmul.mubr.f32.gmra.mxu0 %v244
  %v609 = vpop.f32.mrf.mxu0
  %v610 = vadd.f32 %v84, %v609
  %v611 = vpop.f32.mrf.mxu0
  %612 = vmatprep.mubr.f32.mxu0 0.0
  %613 = vmatmul.mubr.f32.gmra.mxu0 %v247
  %v614 = vpop.f32.mrf.mxu0
  %v615 = vadd.f32 %v84, %v614
  %v616 = vpop.f32.mrf.mxu0
  %617 = vmatprep.mubr.f32.mxu0 0.0
  %618 = vmatmul.mubr.f32.gmra.mxu0 %v250
  %v619 = vpop.f32.mrf.mxu0
  %v620 = vadd.f32 %v84, %v619
  %v621 = vpop.f32.mrf.mxu0
  %622 = vmatprep.mubr.f32.mxu0 0.0
  %623 = vmatmul.mubr.f32.gmra.mxu0 %v253
  %v624 = vpop.f32.mrf.mxu0
  %v625 = vadd.f32 %v84, %v624
  %v626 = vpop.f32.mrf.mxu0
  %627 = vmatprep.mubr.f32.mxu0 0.0
  %628 = vmatmul.mubr.f32.gmra.mxu0 %v256
  %v629 = vpop.f32.mrf.mxu0
  %v630 = vadd.f32 %v84, %v629
  %v631 = vpop.f32.mrf.mxu0
  %632 = vmatprep.mubr.f32.mxu0 0.0
  %633 = vmatmul.mubr.f32.gmra.mxu0 %v259
  %v634 = vpop.f32.mrf.mxu0
  %v635 = vadd.f32 %v84, %v634
  %v636 = vpop.f32.mrf.mxu0
  %637 = vmatprep.mubr.f32.mxu0 0.0
  %638 = vmatmul.mubr.f32.gmra.mxu0 %v262
  %v639 = vpop.f32.mrf.mxu0
  %v640 = vadd.f32 %v84, %v639
  %v641 = vpop.f32.mrf.mxu0
  %642 = vmatprep.mubr.f32.mxu0 0.0
  %643 = vmatmul.mubr.f32.gmra.mxu0 %v265
  %v644 = vpop.f32.mrf.mxu0
  %v645 = vadd.f32 %v84, %v644
  %v646 = vpop.f32.mrf.mxu0
  %647 = vmatprep.mubr.f32.mxu0 0.0
  %648 = vmatmul.mubr.f32.gmra.mxu0 %v268
  %v649 = vpop.f32.mrf.mxu0
  %v650 = vadd.f32 %v84, %v649
  %v651 = vpop.f32.mrf.mxu0
  %652 = vmatprep.mubr.f32.mxu0 0.0
  %653 = vmatmul.mubr.f32.gmra.mxu0 %v271
  %v654 = vpop.f32.mrf.mxu0
  %v655 = vadd.f32 %v84, %v654
  %v656 = vpop.f32.mrf.mxu0
  %657 = vmatprep.mubr.f32.mxu0 0.0
  %658 = vmatmul.mubr.f32.gmra.mxu0 %v274
  %v659 = vpop.f32.mrf.mxu0
  %v660 = vadd.f32 %v84, %v659
  %v661 = vpop.f32.mrf.mxu0
  %662 = vmatprep.mubr.f32.mxu0 0.0
  %663 = vmatmul.mubr.f32.gmra.mxu0 %v277
  %v664 = vpop.f32.mrf.mxu0
  %v665 = vadd.f32 %v84, %v664
  %v666 = vpop.f32.mrf.mxu0
  %667 = vdwg.mxu0
  %v668 = vmax.f32 %v350, 0.0
  %v669 = vmax.f32 %v355, 0.0
  %v670 = vmax.f32 %v360, 0.0
  %v671 = vmax.f32 %v365, 0.0
  %v672 = vmax.f32 %v370, 0.0
  %v673 = vmax.f32 %v375, 0.0
  %v674 = vmax.f32 %v380, 0.0
  %v675 = vmax.f32 %v385, 0.0
  %v676 = vmax.f32 %v390, 0.0
  %v677 = vmax.f32 %v395, 0.0
  %v678 = vmax.f32 %v400, 0.0
  %v679 = vmax.f32 %v405, 0.0
  %v680 = vmax.f32 %v410, 0.0
  %v681 = vmax.f32 %v415, 0.0
  %v682 = vmax.f32 %v420, 0.0
  %v683 = vmax.f32 %v425, 0.0
  %v684 = vmax.f32 %v430, 0.0
  %v685 = vmax.f32 %v435, 0.0
  %v686 = vmax.f32 %v440, 0.0
  %v687 = vmax.f32 %v445, 0.0
  %v688 = vmax.f32 %v450, 0.0
  %v689 = vmax.f32 %v455, 0.0
  %v690 = vmax.f32 %v460, 0.0
  %v691 = vmax.f32 %v465, 0.0
  %v692 = vmax.f32 %v470, 0.0
  %v693 = vmax.f32 %v475, 0.0
  %v694 = vmax.f32 %v480, 0.0
  %v695 = vmax.f32 %v485, 0.0
  %v696 = vmax.f32 %v490, 0.0
  %v697 = vmax.f32 %v495, 0.0
  %v698 = vmax.f32 %v500, 0.0
  %v699 = vmax.f32 %v505, 0.0
  %v700 = vmax.f32 %v510, 0.0
  %v701 = vmax.f32 %v515, 0.0
  %v702 = vmax.f32 %v520, 0.0
  %v703 = vmax.f32 %v525, 0.0
  %v704 = vmax.f32 %v530, 0.0
  %v705 = vmax.f32 %v535, 0.0
  %v706 = vmax.f32 %v540, 0.0
  %v707 = vmax.f32 %v545, 0.0
  %v708 = vmax.f32 %v550, 0.0
  %v709 = vmax.f32 %v555, 0.0
  %v710 = vmax.f32 %v560, 0.0
  %v711 = vmax.f32 %v565, 0.0
  %v712 = vmax.f32 %v570, 0.0
  %v713 = vmax.f32 %v575, 0.0
  %v714 = vmax.f32 %v580, 0.0
  %v715 = vmax.f32 %v585, 0.0
  %v716 = vmax.f32 %v590, 0.0
  %v717 = vmax.f32 %v595, 0.0
  %v718 = vmax.f32 %v600, 0.0
  %v719 = vmax.f32 %v605, 0.0
  %v720 = vmax.f32 %v610, 0.0
  %v721 = vmax.f32 %v615, 0.0
  %v722 = vmax.f32 %v620, 0.0
  %v723 = vmax.f32 %v625, 0.0
  %v724 = vmax.f32 %v630, 0.0
  %v725 = vmax.f32 %v635, 0.0
  %v726 = vmax.f32 %v640, 0.0
  %v727 = vmax.f32 %v645, 0.0
  %v728 = vmax.f32 %v650, 0.0
  %v729 = vmax.f32 %v655, 0.0
  %v730 = vmax.f32 %v660, 0.0
  %v731 = vmax.f32 %v665, 0.0
  %732 = vst.msk [vmem:[%s3] sm:$0xff] %vm86, %v668
  %733 = vst.msk [vmem:[%s3 + $0x8] sm:$0xff] %vm86, %v669
  %734 = vst.msk [vmem:[%s3 + $0x10] sm:$0xff] %vm86, %v670
  %735 = vst.msk [vmem:[%s3 + $0x18] sm:$0xff] %vm86, %v671
  %736 = vst.msk [vmem:[%s3 + $0x20] sm:$0xff] %vm86, %v672
  %737 = vst.msk [vmem:[%s3 + $0x28] sm:$0xff] %vm86, %v673
  %738 = vst.msk [vmem:[%s3 + $0x30] sm:$0xff] %vm86, %v674
  %739 = vst.msk [vmem:[%s3 + $0x38] sm:$0xff] %vm86, %v675
  %740 = vst.msk [vmem:[%s3 + $0x40] sm:$0xff] %vm86, %v676
  %741 = vst.msk [vmem:[%s3 + $0x48] sm:$0xff] %vm86, %v677
  %742 = vst.msk [vmem:[%s3 + $0x50] sm:$0xff] %vm86, %v678
  %743 = vst.msk [vmem:[%s3 + $0x58] sm:$0xff] %vm86, %v679
  %744 = vst.msk [vmem:[%s3 + $0x60] sm:$0xff] %vm86, %v680
  %745 = vst.msk [vmem:[%s3 + $0x68] sm:$0xff] %vm86, %v681
  %746 = vst.msk [vmem:[%s3 + $0x70] sm:$0xff] %vm86, %v682
  %747 = vst.msk [vmem:[%s3 + $0x78] sm:$0xff] %vm86, %v683
  %748 = vst.msk [vmem:[%s3 + $0x80] sm:$0xff] %vm86, %v684
  %749 = vst.msk [vmem:[%s3 + $0x88] sm:$0xff] %vm86, %v685
  %750 = vst.msk [vmem:[%s3 + $0x90] sm:$0xff] %vm86, %v686
  %751 = vst.msk [vmem:[%s3 + $0x98] sm:$0xff] %vm86, %v687
  %752 = vst.msk [vmem:[%s3 + $0xa0] sm:$0xff] %vm86, %v688
  %753 = vst.msk [vmem:[%s3 + $0xa8] sm:$0xff] %vm86, %v689
  %754 = vst.msk [vmem:[%s3 + $0xb0] sm:$0xff] %vm86, %v690
  %755 = vst.msk [vmem:[%s3 + $0xb8] sm:$0xff] %vm86, %v691
  %756 = vst.msk [vmem:[%s3 + $0xc0] sm:$0xff] %vm86, %v692
  %757 = vst.msk [vmem:[%s3 + $0xc8] sm:$0xff] %vm86, %v693
  %758 = vst.msk [vmem:[%s3 + $0xd0] sm:$0xff] %vm86, %v694
  %759 = vst.msk [vmem:[%s3 + $0xd8] sm:$0xff] %vm86, %v695
  %760 = vst.msk [vmem:[%s3 + $0xe0] sm:$0xff] %vm86, %v696
  %761 = vst.msk [vmem:[%s3 + $0xe8] sm:$0xff] %vm86, %v697
  %762 = vst.msk [vmem:[%s3 + $0xf0] sm:$0xff] %vm86, %v698
  %763 = vst.msk [vmem:[%s3 + $0xf8] sm:$0xff] %vm86, %v699
  %764 = vst.msk [vmem:[%s3 + $0x100] sm:$0xff] %vm86, %v700
  %765 = vst.msk [vmem:[%s3 + $0x108] sm:$0xff] %vm86, %v701
  %766 = vst.msk [vmem:[%s3 + $0x110] sm:$0xff] %vm86, %v702
  %767 = vst.msk [vmem:[%s3 + $0x118] sm:$0xff] %vm86, %v703
  %768 = vst.msk [vmem:[%s3 + $0x120] sm:$0xff] %vm86, %v704
  %769 = vst.msk [vmem:[%s3 + $0x128] sm:$0xff] %vm86, %v705
  %770 = vst.msk [vmem:[%s3 + $0x130] sm:$0xff] %vm86, %v706
  %771 = vst.msk [vmem:[%s3 + $0x138] sm:$0xff] %vm86, %v707
  %772 = vst.msk [vmem:[%s3 + $0x140] sm:$0xff] %vm86, %v708
  %773 = vst.msk [vmem:[%s3 + $0x148] sm:$0xff] %vm86, %v709
  %774 = vst.msk [vmem:[%s3 + $0x150] sm:$0xff] %vm86, %v710
  %775 = vst.msk [vmem:[%s3 + $0x158] sm:$0xff] %vm86, %v711
  %776 = vst.msk [vmem:[%s3 + $0x160] sm:$0xff] %vm86, %v712
  %777 = vst.msk [vmem:[%s3 + $0x168] sm:$0xff] %vm86, %v713
  %778 = vst.msk [vmem:[%s3 + $0x170] sm:$0xff] %vm86, %v714
  %779 = vst.msk [vmem:[%s3 + $0x178] sm:$0xff] %vm86, %v715
  %780 = vst.msk [vmem:[%s3 + $0x180] sm:$0xff] %vm86, %v716
  %781 = vst.msk [vmem:[%s3 + $0x188] sm:$0xff] %vm86, %v717
  %782 = vst.msk [vmem:[%s3 + $0x190] sm:$0xff] %vm86, %v718
  %783 = vst.msk [vmem:[%s3 + $0x198] sm:$0xff] %vm86, %v719
  %784 = vst.msk [vmem:[%s3 + $0x1a0] sm:$0xff] %vm86, %v720
  %785 = vst.msk [vmem:[%s3 + $0x1a8] sm:$0xff] %vm86, %v721
  %786 = vst.msk [vmem:[%s3 + $0x1b0] sm:$0xff] %vm86, %v722
  %787 = vst.msk [vmem:[%s3 + $0x1b8] sm:$0xff] %vm86, %v723
  %788 = vst.msk [vmem:[%s3 + $0x1c0] sm:$0xff] %vm86, %v724
  %789 = vst.msk [vmem:[%s3 + $0x1c8] sm:$0xff] %vm86, %v725
  %790 = vst.msk [vmem:[%s3 + $0x1d0] sm:$0xff] %vm86, %v726
  %791 = vst.msk [vmem:[%s3 + $0x1d8] sm:$0xff] %vm86, %v727
  %792 = vst.msk [vmem:[%s3 + $0x1e0] sm:$0xff] %vm86, %v728
  %793 = vst.msk [vmem:[%s3 + $0x1e8] sm:$0xff] %vm86, %v729
  %794 = vst.msk [vmem:[%s3 + $0x1f0] sm:$0xff] %vm86, %v730
  %795 = vst.msk [vmem:[%s3 + $0x1f8] sm:$0xff] %vm86, %v731
  // Predicated region
  $region14: #{tpu_custom_call.1} parent=0 // pred_check
    _
  $region15: #{tpu_custom_call.1} parent=0 // pred_check_branch
    %797 = sbr.rel (0) target = $region17
  $region16: #{tpu_custom_call.1} parent=0 // pred_region
    _
  $region17: #{tpu_custom_call.1} parent=0 // pred_fallthru
    _
  // Predicated region
  $region18: #{tpu_custom_call.1} parent=0 // pred_check
    _
  $region19: #{tpu_custom_call.1} parent=0 // pred_check_branch
    %799 = sbr.rel (0) target = $region21
  $region20: #{tpu_custom_call.1} parent=0 // pred_region
    _
  $region21: #{tpu_custom_call.1} parent=0 // pred_fallthru
    _

</llo_original>
